<compile_context>
chip_gen: v7x
topology: tpu7x:2x2x1
jax: 0.10.0
libtpu: 0.0.40
codegen_flags: <defaults>
</compile_context>

<pallas_src>
import functools

import jax
import jax.numpy as jnp
from jax import lax
from jax.experimental import pallas as pl
from jax.experimental.pallas import tpu as pltpu


def _fused_primary_caps_kernel(patches_ref, w_ref, b_ref, out_ref, *,
                               n_pix, num_caps, out_channels):
    """One batch element per grid step.

    patches_ref: (1, P, Kdim)            im2col rows, contraction order (c,kh,kw)
    w_ref:       (Kdim, OC*num_caps)     cap-minor columns: col = oc*num_caps + cap
    b_ref:       (1, OC*num_caps)
    out_ref:     (1, OC*P, num_caps)     final u_squashed layout (PyTorch order)
    """
    # All-capsule conv for this batch element as one MXU matmul, f32 accumulate.
    acc = jnp.dot(patches_ref[0], w_ref[...],
                  preferred_element_type=jnp.float32) + b_ref[...]     # (P, Ctot)

    # Fused squash epilogue.  For out-channel `oc`, the capsule vector of
    # output row oc*P + p is exactly acc[p, oc*num_caps:(oc+1)*num_caps].
    slabs = []
    for oc in range(out_channels):                       # static unroll (small)
        v = acc[:, oc * num_caps:(oc + 1) * num_caps]    # (P, num_caps)
        sq = jnp.sum(v * v, axis=-1, keepdims=True)      # (P, 1)
        # squash scale = sq/(1+sq) / sqrt(sq) = sq*rsqrt(sq)/(1+sq); rsqrt -> EUP
        scale = sq * lax.rsqrt(sq) / (1.0 + sq)
        slabs.append(v * scale)                          # (P, num_caps)
    out_ref[0] = jnp.concatenate(slabs, axis=0)          # (OC*P, num_caps)


def primary_caps_forward(x, weights, biases, *, stride=2):
    """x: (B, C, H, W) f32; weights: (num_caps, OC, C, K, K); biases: (num_caps, OC).

    Returns u_squashed with shape (B, OC * Ho*Wo, num_caps), matching PyTorch.
    """
    B, C, H, W = x.shape
    num_caps, OC, _, K, _ = weights.shape
    Ho = (H - K) // stride + 1
    Wo = (W - K) // stride + 1
    P = Ho * Wo
    Kdim = C * K * K
    Ctot = num_caps * OC

    # --- glue: im2col (pure data movement; contraction order (c, kh, kw)) ---
    ih = (jnp.arange(Ho) * stride)[:, None] + jnp.arange(K)[None, :]    # (Ho, K)
    iw = (jnp.arange(Wo) * stride)[:, None] + jnp.arange(K)[None, :]    # (Wo, K)
    patches = x[:, :, ih[:, None, :, None], iw[None, :, None, :]]       # (B, C, Ho, Wo, K, K)
    patches = patches.transpose(0, 2, 3, 1, 4, 5).reshape(B, P, Kdim)

    # Weight matrix with CAP-MINOR column ordering: col = oc*num_caps + cap.
    w_mat = (weights.transpose(1, 0, 2, 3, 4)            # (OC, num_caps, C, K, K)
                    .reshape(Ctot, Kdim).T               # (Kdim, Ctot)
                    .astype(jnp.float32))
    b_row = biases.T.reshape(1, Ctot).astype(jnp.float32)

    kernel = functools.partial(_fused_primary_caps_kernel,
                               n_pix=P, num_caps=num_caps, out_channels=OC)

    out = pl.pallas_call(
        kernel,
        out_shape=jax.ShapeDtypeStruct((B, OC * P, num_caps), jnp.float32),
        grid_spec=pltpu.PrefetchScalarGridSpec(
            num_scalar_prefetch=0,
            grid=(B,),
            in_specs=[
                pl.BlockSpec((1, P, Kdim), lambda b: (b, 0, 0)),
                # Constant index maps -> weights & bias fetched once, stay VMEM-resident.
                pl.BlockSpec((Kdim, Ctot), lambda b: (0, 0)),
                pl.BlockSpec((1, Ctot), lambda b: (0, 0)),
            ],
            out_specs=pl.BlockSpec((1, OC * P, num_caps), lambda b: (b, 0, 0))),
        compiler_params=pltpu.CompilerParams(dimension_semantics=("parallel",)),
    )(patches, w_mat, b_row)
    return out


def _reference_forward(x, weights, biases, *, stride=2):
    """Pure-JAX reference mirroring the PyTorch module."""
    B = x.shape[0]
    num_caps, OC, _, K, _ = weights.shape
    outs = []
    for c in range(num_caps):
        y = lax.conv_general_dilated(
            x, weights[c], window_strides=(stride, stride), padding="VALID",
            dimension_numbers=("NCHW", "OIHW", "NCHW"))
        y = y + biases[c][None, :, None, None]
        outs.append(y.reshape(B, -1, 1))
    u = jnp.concatenate(outs, axis=-1)
    sq = jnp.sum(u ** 2, axis=-1, keepdims=True)
    return (sq / (1.0 + sq)) * u / jnp.sqrt(sq)


if __name__ == "__main__":
    # Small config consistent with PrimaryCaps: num_capsules=8, kernel=9, stride=2.
    B, C, H, W = 2, 4, 16, 16            # -> conv output 4x4, so PrimaryCaps_n_pix = 16
    num_caps, OC, K, stride = 8, 8, 9, 2

    key = jax.random.PRNGKey(0)
    kx, kw, kb = jax.random.split(key, 3)
    x = jax.random.normal(kx, (B, C, H, W), dtype=jnp.float32)
    weights = 0.05 * jax.random.normal(kw, (num_caps, OC, C, K, K), dtype=jnp.float32)
    biases = 0.01 * jax.random.normal(kb, (num_caps, OC), dtype=jnp.float32)

    out = primary_caps_forward(x, weights, biases, stride=stride)
    out = jax.block_until_ready(out)

    ref = _reference_forward(x, weights, biases, stride=stride)
    assert out.shape == (B, OC * (((H - K) // stride + 1) ** 2), num_caps)
    assert jnp.allclose(out, ref, rtol=2e-4, atol=2e-4), (
        f"max abs err {jnp.max(jnp.abs(out - ref))}")

    print("KERNEL_OK")
</pallas_src>

<mosaic_0001>
module attributes {stable_mosaic.version = 11 : i64} {
  func.func @_fused_primary_caps_kernel(%arg0: i32, %arg1: memref<1x16x324xf32, #tpu.memory_space<vmem>>, %arg2: memref<324x64xf32, #tpu.memory_space<vmem>>, %arg3: memref<1x64xf32, #tpu.memory_space<vmem>>, %arg4: memref<1x128x8xf32, #tpu.memory_space<vmem>>) attributes {dimension_semantics = [#tpu.dimension_semantics<parallel>], iteration_bounds = array<i64: 2>, scalar_prefetch = 0 : i64, scratch_operands = 0 : i64, tpu.core_type = #tpu.core_type<tc>, window_params = [{transform_indices = @transform_0, window_bounds = array<i64: 1, 16, 324>}, {pipeline_mode = #tpu.pipeline_mode<synchronous>, transform_indices = @transform_1, window_bounds = array<i64: 324, 64>}, {pipeline_mode = #tpu.pipeline_mode<synchronous>, transform_indices = @transform_2, window_bounds = array<i64: 1, 64>}, {transform_indices = @transform_3, window_bounds = array<i64: 1, 128, 8>}]} {
    %c0 = arith.constant 0 : index
    %c0_0 = arith.constant 0 : index
    %c0_1 = arith.constant 0 : index
    %0 = vector.load %arg1[%c0, %c0_0, %c0_1] : memref<1x16x324xf32, #tpu.memory_space<vmem>>, vector<1x16x324xf32>
    %1 = vector.shape_cast %0 : vector<1x16x324xf32> to vector<16x324xf32>
    %c0_2 = arith.constant 0 : index
    %c0_3 = arith.constant 0 : index
    %2 = vector.load %arg2[%c0_2, %c0_3] : memref<324x64xf32, #tpu.memory_space<vmem>>, vector<324x64xf32>
    %cst = arith.constant dense<0.000000e+00> : vector<16x64xf32>
    %3 = tpu.matmul %1, %2, %cst {dimension_numbers = #tpu.dot_dimension_numbers<[1], [0], [0], [1], [0, 0, 1, 1], [], []>} : vector<16x324xf32>, vector<324x64xf32>, vector<16x64xf32> -> vector<16x64xf32>
    %c0_4 = arith.constant 0 : index
    %c0_5 = arith.constant 0 : index
    %4 = vector.load %arg3[%c0_4, %c0_5] : memref<1x64xf32, #tpu.memory_space<vmem>>, vector<1x64xf32>
    %5 = vector.broadcast %4 : vector<1x64xf32> to vector<16x64xf32>
    %6 = arith.addf %3, %5 : vector<16x64xf32>
    %7 = vector.extract_strided_slice %6 {offsets = [0, 0], sizes = [16, 8], strides = [1, 1]} : vector<16x64xf32> to vector<16x8xf32>
    %8 = arith.mulf %7, %7 : vector<16x8xf32>
    %cst_6 = arith.constant dense<0.000000e+00> : vector<16xf32>
    %9 = vector.multi_reduction <add>, %8, %cst_6 [1] : vector<16x8xf32> to vector<16xf32>
    %10 = vector.shape_cast %9 : vector<16xf32> to vector<16x1xf32>
    %11 = math.rsqrt %10 : vector<16x1xf32>
    %12 = arith.mulf %10, %11 : vector<16x1xf32>
    %cst_7 = arith.constant 1.000000e+00 : f32
    %13 = vector.broadcast %cst_7 : f32 to vector<16x1xf32>
    %14 = arith.addf %13, %10 : vector<16x1xf32>
    %15 = arith.divf %12, %14 : vector<16x1xf32>
    %16 = vector.broadcast %15 : vector<16x1xf32> to vector<16x8xf32>
    %17 = arith.mulf %7, %16 : vector<16x8xf32>
    %18 = vector.extract_strided_slice %6 {offsets = [0, 8], sizes = [16, 8], strides = [1, 1]} : vector<16x64xf32> to vector<16x8xf32>
    %19 = arith.mulf %18, %18 : vector<16x8xf32>
    %cst_8 = arith.constant dense<0.000000e+00> : vector<16xf32>
    %20 = vector.multi_reduction <add>, %19, %cst_8 [1] : vector<16x8xf32> to vector<16xf32>
    %21 = vector.shape_cast %20 : vector<16xf32> to vector<16x1xf32>
    %22 = math.rsqrt %21 : vector<16x1xf32>
    %23 = arith.mulf %21, %22 : vector<16x1xf32>
    %cst_9 = arith.constant 1.000000e+00 : f32
    %24 = vector.broadcast %cst_9 : f32 to vector<16x1xf32>
    %25 = arith.addf %24, %21 : vector<16x1xf32>
    %26 = arith.divf %23, %25 : vector<16x1xf32>
    %27 = vector.broadcast %26 : vector<16x1xf32> to vector<16x8xf32>
    %28 = arith.mulf %18, %27 : vector<16x8xf32>
    %29 = vector.extract_strided_slice %6 {offsets = [0, 16], sizes = [16, 8], strides = [1, 1]} : vector<16x64xf32> to vector<16x8xf32>
    %30 = arith.mulf %29, %29 : vector<16x8xf32>
    %cst_10 = arith.constant dense<0.000000e+00> : vector<16xf32>
    %31 = vector.multi_reduction <add>, %30, %cst_10 [1] : vector<16x8xf32> to vector<16xf32>
    %32 = vector.shape_cast %31 : vector<16xf32> to vector<16x1xf32>
    %33 = math.rsqrt %32 : vector<16x1xf32>
    %34 = arith.mulf %32, %33 : vector<16x1xf32>
    %cst_11 = arith.constant 1.000000e+00 : f32
    %35 = vector.broadcast %cst_11 : f32 to vector<16x1xf32>
    %36 = arith.addf %35, %32 : vector<16x1xf32>
    %37 = arith.divf %34, %36 : vector<16x1xf32>
    %38 = vector.broadcast %37 : vector<16x1xf32> to vector<16x8xf32>
    %39 = arith.mulf %29, %38 : vector<16x8xf32>
    %40 = vector.extract_strided_slice %6 {offsets = [0, 24], sizes = [16, 8], strides = [1, 1]} : vector<16x64xf32> to vector<16x8xf32>
    %41 = arith.mulf %40, %40 : vector<16x8xf32>
    %cst_12 = arith.constant dense<0.000000e+00> : vector<16xf32>
    %42 = vector.multi_reduction <add>, %41, %cst_12 [1] : vector<16x8xf32> to vector<16xf32>
    %43 = vector.shape_cast %42 : vector<16xf32> to vector<16x1xf32>
    %44 = math.rsqrt %43 : vector<16x1xf32>
    %45 = arith.mulf %43, %44 : vector<16x1xf32>
    %cst_13 = arith.constant 1.000000e+00 : f32
    %46 = vector.broadcast %cst_13 : f32 to vector<16x1xf32>
    %47 = arith.addf %46, %43 : vector<16x1xf32>
    %48 = arith.divf %45, %47 : vector<16x1xf32>
    %49 = vector.broadcast %48 : vector<16x1xf32> to vector<16x8xf32>
    %50 = arith.mulf %40, %49 : vector<16x8xf32>
    %51 = vector.extract_strided_slice %6 {offsets = [0, 32], sizes = [16, 8], strides = [1, 1]} : vector<16x64xf32> to vector<16x8xf32>
    %52 = arith.mulf %51, %51 : vector<16x8xf32>
    %cst_14 = arith.constant dense<0.000000e+00> : vector<16xf32>
    %53 = vector.multi_reduction <add>, %52, %cst_14 [1] : vector<16x8xf32> to vector<16xf32>
    %54 = vector.shape_cast %53 : vector<16xf32> to vector<16x1xf32>
    %55 = math.rsqrt %54 : vector<16x1xf32>
    %56 = arith.mulf %54, %55 : vector<16x1xf32>
    %cst_15 = arith.constant 1.000000e+00 : f32
    %57 = vector.broadcast %cst_15 : f32 to vector<16x1xf32>
    %58 = arith.addf %57, %54 : vector<16x1xf32>
    %59 = arith.divf %56, %58 : vector<16x1xf32>
    %60 = vector.broadcast %59 : vector<16x1xf32> to vector<16x8xf32>
    %61 = arith.mulf %51, %60 : vector<16x8xf32>
    %62 = vector.extract_strided_slice %6 {offsets = [0, 40], sizes = [16, 8], strides = [1, 1]} : vector<16x64xf32> to vector<16x8xf32>
    %63 = arith.mulf %62, %62 : vector<16x8xf32>
    %cst_16 = arith.constant dense<0.000000e+00> : vector<16xf32>
    %64 = vector.multi_reduction <add>, %63, %cst_16 [1] : vector<16x8xf32> to vector<16xf32>
    %65 = vector.shape_cast %64 : vector<16xf32> to vector<16x1xf32>
    %66 = math.rsqrt %65 : vector<16x1xf32>
    %67 = arith.mulf %65, %66 : vector<16x1xf32>
    %cst_17 = arith.constant 1.000000e+00 : f32
    %68 = vector.broadcast %cst_17 : f32 to vector<16x1xf32>
    %69 = arith.addf %68, %65 : vector<16x1xf32>
    %70 = arith.divf %67, %69 : vector<16x1xf32>
    %71 = vector.broadcast %70 : vector<16x1xf32> to vector<16x8xf32>
    %72 = arith.mulf %62, %71 : vector<16x8xf32>
    %73 = vector.extract_strided_slice %6 {offsets = [0, 48], sizes = [16, 8], strides = [1, 1]} : vector<16x64xf32> to vector<16x8xf32>
    %74 = arith.mulf %73, %73 : vector<16x8xf32>
    %cst_18 = arith.constant dense<0.000000e+00> : vector<16xf32>
    %75 = vector.multi_reduction <add>, %74, %cst_18 [1] : vector<16x8xf32> to vector<16xf32>
    %76 = vector.shape_cast %75 : vector<16xf32> to vector<16x1xf32>
    %77 = math.rsqrt %76 : vector<16x1xf32>
    %78 = arith.mulf %76, %77 : vector<16x1xf32>
    %cst_19 = arith.constant 1.000000e+00 : f32
    %79 = vector.broadcast %cst_19 : f32 to vector<16x1xf32>
    %80 = arith.addf %79, %76 : vector<16x1xf32>
    %81 = arith.divf %78, %80 : vector<16x1xf32>
    %82 = vector.broadcast %81 : vector<16x1xf32> to vector<16x8xf32>
    %83 = arith.mulf %73, %82 : vector<16x8xf32>
    %84 = vector.extract_strided_slice %6 {offsets = [0, 56], sizes = [16, 8], strides = [1, 1]} : vector<16x64xf32> to vector<16x8xf32>
    %85 = arith.mulf %84, %84 : vector<16x8xf32>
    %cst_20 = arith.constant dense<0.000000e+00> : vector<16xf32>
    %86 = vector.multi_reduction <add>, %85, %cst_20 [1] : vector<16x8xf32> to vector<16xf32>
    %87 = vector.shape_cast %86 : vector<16xf32> to vector<16x1xf32>
    %88 = math.rsqrt %87 : vector<16x1xf32>
    %89 = arith.mulf %87, %88 : vector<16x1xf32>
    %cst_21 = arith.constant 1.000000e+00 : f32
    %90 = vector.broadcast %cst_21 : f32 to vector<16x1xf32>
    %91 = arith.addf %90, %87 : vector<16x1xf32>
    %92 = arith.divf %89, %91 : vector<16x1xf32>
    %93 = vector.broadcast %92 : vector<16x1xf32> to vector<16x8xf32>
    %94 = arith.mulf %84, %93 : vector<16x8xf32>
    %95 = tpu.concatenate %17, %28, %39, %50, %61, %72, %83, %94 in 0 : vector<16x8xf32>, vector<16x8xf32>, vector<16x8xf32>, vector<16x8xf32>, vector<16x8xf32>, vector<16x8xf32>, vector<16x8xf32>, vector<16x8xf32> -> vector<128x8xf32>
    %c0_22 = arith.constant 0 : index
    %c0_23 = arith.constant 0 : index
    %c0_24 = arith.constant 0 : index
    %96 = vector.load %arg4[%c0_22, %c0_23, %c0_24] : memref<1x128x8xf32, #tpu.memory_space<vmem>>, vector<1x128x8xf32>
    %97 = vector.shape_cast %96 : vector<1x128x8xf32> to vector<128x8xf32>
    %98 = vector.shape_cast %95 : vector<128x8xf32> to vector<1x128x8xf32>
    tpu.vector_store %arg4[%c0_22, %c0_23, %c0_24], %98 {strides = array<i32>} : memref<1x128x8xf32, #tpu.memory_space<vmem>>, vector<1x128x8xf32>,
    return
  }
  func.func @transform_0(%arg0: i32) -> (i32, i32, i32) {
    %c0_i32 = arith.constant 0 : i32
    %c0_i32_0 = arith.constant 0 : i32
    %c0_i32_1 = arith.constant 0 : i32
    return %arg0, %c0_i32, %c0_i32_0 : i32, i32, i32
  }
  func.func @transform_1(%arg0: i32) -> (i32, i32) {
    %c0_i32 = arith.constant 0 : i32
    %c0_i32_0 = arith.constant 0 : i32
    %c0_i32_1 = arith.constant 0 : i32
    return %c0_i32, %c0_i32_0 : i32, i32
  }
  func.func @transform_2(%arg0: i32) -> (i32, i32) {
    %c0_i32 = arith.constant 0 : i32
    %c0_i32_0 = arith.constant 0 : i32
    %c0_i32_1 = arith.constant 0 : i32
    return %c0_i32, %c0_i32_0 : i32, i32
  }
  func.func @transform_3(%arg0: i32) -> (i32, i32, i32) {
    %c0_i32 = arith.constant 0 : i32
    %c0_i32_0 = arith.constant 0 : i32
    %c0_i32_1 = arith.constant 0 : i32
    return %arg0, %c0_i32, %c0_i32_0 : i32, i32, i32
  }
}

</mosaic_0001>

<llo_original>
// kernel: tpu_custom_call.1
$region0: #{tpu_custom_call.1}
  #allocation0 [shape = 'u32[]', space=smem, size = 0x4, offset = 0x4, fixed_abs, tag = 'smem constant byte address 0x4 - core index']
  #allocation1 [shape = 'u32[144,128]{1,0:T(1,128)}', space=vmem, size = 0x12000, scoped, tag = 'internal scratch']
  %s0 = inlined_call_operand.vmem [shape: f32[2,16,324], index: 0, kind: input, shape index: {}]
  %s1 = inlined_call_operand.vmem [shape: f32[324,64], index: 1, kind: input, shape index: {}]
  %s2 = inlined_call_operand.vmem [shape: f32[1,64], index: 2, kind: input, shape index: {}]
  %s3 = inlined_call_operand.vmem [shape: f32[2,128,8], index: 3, kind: output, shape index: {}]
  %s4 = sld [smem:[#allocation0]]
  $region45: #{tpu_custom_call.1} parent=0
    _
  %s6 = ssub.s32 1, %s4
  %s7 = scalar_select 0, %s6, %s4
  loop: start=0, step=1, limit=4
  $region2: #{tpu_custom_call.1} parent=0 // loop_pre_header
    _
  $region3: #{tpu_custom_call.1} parent=0 // loop_header
    %s9 = sphi 0, %s13
    %p10 = scmp.ge.s32.totalorder %s9, 4
    %s19 = sphi 0, %s21
    %s22 = sphi 0, %s19
    %s23 = sphi 0, %s22
    %s39 = sphi 0, %s23
    %s43 = sphi 0, %s43
    %s45 = sphi 0, %s43
    %s46 = sphi 0, %s45
    %s60 = sphi 0, %s46
    %s64 = sphi 0, %s64
    %s66 = sphi 0, %s64
    %s67 = sphi 0, %s66
    %s81 = sphi 0, %s67
    %s87 = sphi 0, %s89
    %s90 = sphi 0, %s87
    %s91 = sphi 0, %s90
    %s107 = sphi 0, %s91
  $region4: #{tpu_custom_call.1} parent=0 // loop_header_branch
    %12 = sbr.rel (%p10) target = $region8
  $region5: #{tpu_custom_call.1} parent=0 // loop_body
    %s14 = ssub.s32 %s9, 1
    %s15 = ssub.s32 %s9, 2
    %s16 = sadd.s32 %s9, 1
    %s17 = ssub.s32 %s9, %s16
    %p18 = scmp.eq.s32.totalorder %s17, 0
    %s20 = sadd.s32 %s19, 1
    %s21 = scalar_select %p18, %s19, %s20
    %p24 = pneg %p18
    %p25 = scmp.eq.s32.totalorder %s9, 1
    %p26 = por %p24, %p25
    %p27 = scmp.ne.s32.totalorder %s19, %s22
    %p28 = scmp.eq.s32.totalorder %s9, 0
    %p29 = por %p27, %p28
    %p30 = scmp.ne.s32.totalorder %s19, %s22
    %p31 = scmp.eq.s32.totalorder %s14, 1
    %p32 = por %p30, %p31
    %p33 = scmp.ne.s32.totalorder %s22, %s23
    %p34 = scmp.eq.s32.totalorder %s14, 0
    %p35 = por %p33, %p34
    %p36 = scmp.ne.s32.totalorder %s22, %s23
    %p37 = scmp.eq.s32.totalorder %s15, 1
    %p38 = por %p36, %p37
    %p40 = scmp.ne.s32.totalorder %s23, %s39
    %p41 = scmp.eq.s32.totalorder %s15, 0
    %p42 = por %p40, %p41
    %s44 = sadd.s32 %s43, 1
    %p47 = scmp.eq.s32.totalorder %s9, 1
    %p48 = scmp.ne.s32.totalorder %s43, %s45
    %p49 = scmp.eq.s32.totalorder %s9, 0
    %p50 = por %p48, %p49
    %p51 = scmp.ne.s32.totalorder %s43, %s45
    %p52 = scmp.eq.s32.totalorder %s14, 1
    %p53 = por %p51, %p52
    %p54 = scmp.ne.s32.totalorder %s45, %s46
    %p55 = scmp.eq.s32.totalorder %s14, 0
    %p56 = por %p54, %p55
    %p57 = scmp.ne.s32.totalorder %s45, %s46
    %p58 = scmp.eq.s32.totalorder %s15, 1
    %p59 = por %p57, %p58
    %p61 = scmp.ne.s32.totalorder %s46, %s60
    %p62 = scmp.eq.s32.totalorder %s15, 0
    %p63 = por %p61, %p62
    %s65 = sadd.s32 %s64, 1
    %p68 = scmp.eq.s32.totalorder %s9, 1
    %p69 = scmp.ne.s32.totalorder %s64, %s66
    %p70 = scmp.eq.s32.totalorder %s9, 0
    %p71 = por %p69, %p70
    %p72 = scmp.ne.s32.totalorder %s64, %s66
    %p73 = scmp.eq.s32.totalorder %s14, 1
    %p74 = por %p72, %p73
    %p75 = scmp.ne.s32.totalorder %s66, %s67
    %p76 = scmp.eq.s32.totalorder %s14, 0
    %p77 = por %p75, %p76
    %p78 = scmp.ne.s32.totalorder %s66, %s67
    %p79 = scmp.eq.s32.totalorder %s15, 1
    %p80 = por %p78, %p79
    %p82 = scmp.ne.s32.totalorder %s67, %s81
    %p83 = scmp.eq.s32.totalorder %s15, 0
    %p84 = por %p82, %p83
    %s85 = ssub.s32 %s9, %s16
    %p86 = scmp.eq.s32.totalorder %s85, 0
    %s88 = sadd.s32 %s87, 1
    %s89 = scalar_select %p86, %s87, %s88
    %p92 = pneg %p86
    %p93 = scmp.eq.s32.totalorder %s9, 1
    %p94 = por %p92, %p93
    %p95 = scmp.ne.s32.totalorder %s87, %s90
    %p96 = scmp.eq.s32.totalorder %s9, 0
    %p97 = por %p95, %p96
    %p98 = scmp.ne.s32.totalorder %s87, %s90
    %p99 = scmp.eq.s32.totalorder %s14, 1
    %p100 = por %p98, %p99
    %p101 = scmp.ne.s32.totalorder %s90, %s91
    %p102 = scmp.eq.s32.totalorder %s14, 0
    %p103 = por %p101, %p102
    %p104 = scmp.ne.s32.totalorder %s90, %s91
    %p105 = scmp.eq.s32.totalorder %s15, 1
    %p106 = por %p104, %p105
    %p108 = scmp.ne.s32.totalorder %s91, %s107
    %p109 = scmp.eq.s32.totalorder %s15, 0
    %p110 = por %p108, %p109
    %p111 = scmp.le.s32.totalorder 1, %s9
    %p112 = scmp.lt.s32.totalorder %s9, 3
    %p113 = pnand %p111, %p112
    %p114 = pneg %p113
    // Predicated region
    $region9: #{tpu_custom_call.1} parent=5 // pred_check
      _
    $region10: #{tpu_custom_call.1} parent=5 // pred_check_branch
      %116 = sbr.rel (%p113) target = $region12
    $region11: #{tpu_custom_call.1} parent=5 // pred_region
      %s117 = ssub.s32 %s9, 1
      // Predicated region
      $region13: #{tpu_custom_call.1} parent=11 // pred_check
        %p118 = pneg %p56
      $region14: #{tpu_custom_call.1} parent=11 // pred_check_branch
        %120 = sbr.rel (%p118) target = $region16
      $region15: #{tpu_custom_call.1} parent=11 // pred_region
        _
      $region16: #{tpu_custom_call.1} parent=11 // pred_fallthru
        _
      // Predicated region
      $region17: #{tpu_custom_call.1} parent=11 // pred_check
        %p121 = pneg %p77
      $region18: #{tpu_custom_call.1} parent=11 // pred_check_branch
        %123 = sbr.rel (%p121) target = $region20
      $region19: #{tpu_custom_call.1} parent=11 // pred_region
        _
      $region20: #{tpu_custom_call.1} parent=11 // pred_fallthru
        _
    $region12: #{tpu_custom_call.1} parent=5 // pred_fallthru
      _
    %p124 = scmp.lt.s32.totalorder %s9, 2
    // Predicated region
    $region21: #{tpu_custom_call.1} parent=5 // pred_check
      %p125 = pneg %p124
    $region22: #{tpu_custom_call.1} parent=5 // pred_check_branch
      %127 = sbr.rel (%p125) target = $region24
    $region23: #{tpu_custom_call.1} parent=5 // pred_region
      // Predicated region
      $region25: #{tpu_custom_call.1} parent=23 // pred_check
        %p128 = pneg %p29
      $region26: #{tpu_custom_call.1} parent=23 // pred_check_branch
        %130 = sbr.rel (%p128) target = $region28
      $region27: #{tpu_custom_call.1} parent=23 // pred_region
        %p131 = scmp.lt.s32.totalorder %s9, 1
        %s132 = scalar_select %p131, %s9, 1
        %s133 = smul.addr %s132, 6
        %s134 = smul.addr %s133, 8
        %s135 = scalar_lea.vmem %s0, %s134
      $region28: #{tpu_custom_call.1} parent=23 // pred_fallthru
        _
    $region24: #{tpu_custom_call.1} parent=5 // pred_fallthru
      _
    %p136 = scmp.le.s32.totalorder 1, %s9
    %p137 = scmp.lt.s32.totalorder %s9, 3
    %p138 = pnand %p136, %p137
    %p139 = pneg %p138
    // Predicated region
    $region29: #{tpu_custom_call.1} parent=5 // pred_check
      _
    $region30: #{tpu_custom_call.1} parent=5 // pred_check_branch
      %141 = sbr.rel (%p138) target = $region32
    $region31: #{tpu_custom_call.1} parent=5 // pred_region
      %s142 = ssub.s32 %s9, 1
      %p143 = scmp.lt.s32.totalorder %s14, 1
      %s144 = scalar_select %p143, %s14, 1
      %s145 = smul.addr %s144, 6
      %s146 = smul.addr %s145, 8
      %s147 = scalar_lea.vmem %s0, %s146
      %p148 = pneg %p35
      %p149 = pneg %p32
      %p150 = pneg %p56
      %p151 = pneg %p53
      %p152 = pneg %p77
      %p153 = pneg %p74
      %p154 = pneg %p103
      %p155 = pneg %p100
      %p156 = scmp.lt.s32.totalorder %s14, 1
      %s157 = scalar_select %p156, %s14, 1
      %s158 = smul.addr %s157, 16
      %s159 = smul.addr %s158, 8
      %s160 = scalar_lea.vmem %s3, %s159
      %p161 = scmp.lt.s32.totalorder %s14, 1
      %s162 = scalar_select %p161, %s14, 1
      %s163 = smul.addr %s162, 6
      %s164 = smul.addr %s163, 8
      %s165 = scalar_lea.vmem %s0, %s164
      %p166 = scmp.lt.s32.totalorder %s14, 1
      %s167 = scalar_select %p166, %s14, 1
      %s168 = smul.addr %s167, 16
      %s169 = smul.addr %s168, 8
      %s170 = scalar_lea.vmem %s3, %s169
      %v171 = vld [vmem:[%s165] sm:$0xff]
      %v172 = vld [vmem:[%s165 + $0x8] sm:$0xff]
      %v173 = vld [vmem:[%s165 + $0x10] sm:$0xff]
      %v174 = vld [vmem:[%s165 + $0x18] sm:$0xff]
      %v175 = vld [vmem:[%s165 + $0x20] sm:$0xff]
      %v176 = vld [vmem:[%s165 + $0x28] sm:$0xff]
      %v177 = vld [vmem:[%s1] sm:$0xff]
      %v178 = vld [vmem:[%s1 + $0x8] sm:$0xff]
      %v179 = vld [vmem:[%s1 + $0x10] sm:$0xff]
      %v180 = vld [vmem:[%s1 + $0x18] sm:$0xff]
      %v181 = vld [vmem:[%s1 + $0x20] sm:$0xff]
      %v182 = vld [vmem:[%s1 + $0x28] sm:$0xff]
      %v183 = vld [vmem:[%s1 + $0x30] sm:$0xff]
      %v184 = vld [vmem:[%s1 + $0x38] sm:$0xff]
      %v185 = vld [vmem:[%s1 + $0x40] sm:$0xff]
      %v186 = vld [vmem:[%s1 + $0x48] sm:$0xff]
      %v187 = vld [vmem:[%s1 + $0x50] sm:$0xff]
      %v188 = vld [vmem:[%s1 + $0x58] sm:$0xff]
      %v189 = vld [vmem:[%s1 + $0x60] sm:$0xff]
      %v190 = vld [vmem:[%s1 + $0x68] sm:$0xff]
      %v191 = vld [vmem:[%s1 + $0x70] sm:$0xff]
      %v192 = vld [vmem:[%s1 + $0x78] sm:$0xff]
      %v193 = vld [vmem:[%s1 + $0x80] sm:$0xff]
      %v194 = vld [vmem:[%s1 + $0x88] sm:$0xff]
      %v195 = vld [vmem:[%s1 + $0x90] sm:$0xff]
      %v196 = vld [vmem:[%s1 + $0x98] sm:$0xff]
      %v197 = vld [vmem:[%s1 + $0xa0] sm:$0xff]
      %v198 = vld [vmem:[%s1 + $0xa8] sm:$0xff]
      %v199 = vld [vmem:[%s1 + $0xb0] sm:$0xff]
      %v200 = vld [vmem:[%s1 + $0xb8] sm:$0xff]
      %v201 = vld [vmem:[%s1 + $0xc0] sm:$0xff]
      %v202 = vld [vmem:[%s1 + $0xc8] sm:$0xff]
      %v203 = vld [vmem:[%s1 + $0xd0] sm:$0xff]
      %v204 = vld [vmem:[%s1 + $0xd8] sm:$0xff]
      %v205 = vld [vmem:[%s1 + $0xe0] sm:$0xff]
      %v206 = vld [vmem:[%s1 + $0xe8] sm:$0xff]
      %v207 = vld [vmem:[%s1 + $0xf0] sm:$0xff]
      %v208 = vld [vmem:[%s1 + $0xf8] sm:$0xff]
      %v209 = vld [vmem:[%s1 + $0x100] sm:$0xff]
      %v210 = vld [vmem:[%s1 + $0x108] sm:$0xff]
      %v211 = vld [vmem:[%s1 + $0x110] sm:$0xff]
      %v212 = vld [vmem:[%s1 + $0x118] sm:$0xff]
      %v213 = vld [vmem:[%s1 + $0x120] sm:$0xff]
      %v214 = vld [vmem:[%s1 + $0x128] sm:$0xff]
      %v215 = vld [vmem:[%s1 + $0x130] sm:$0xff]
      %v216 = vld [vmem:[%s1 + $0x138] sm:$0xff]
      %v217 = vld [vmem:[%s1 + $0x140] sm:$0xf]
      %v218 = vld [vmem:[%s2] sm:$0x1]
      %v220 = vlaneseq
      %v221 = vshrl.u32 %v220, 7
      %v222 = vsub.s32 0, %v221
      %v223 = vrot.slane %v218, %v222
      %vm225 = vcmask 556032
      %v227 = vsel %vm225, %v173, 0
      %v230 = vsel %vm225, %v176, 0
      %vm232 = vcmask 1043456
      %v234 = vsel %vm232, %v217, 0
      %236 = vmatprep.subr.mxu0 0.0
      %237 = vmatpush1.msra.mxu0 %v177
      %238 = vmatprep.subr.mxu0 0.0
      %239 = vmatpush1.msra.mxu0 %v178
      %240 = vmatprep.subr.mxu0 0.0
      %241 = vmatpush1.msra.mxu0 %v179
      %242 = vmatprep.subr.mxu0 0.0
      %243 = vmatpush1.msra.mxu0 %v180
      %244 = vmatprep.subr.mxu0 0.0
      %245 = vmatpush1.msra.mxu0 %v181
      %246 = vmatprep.subr.mxu0 0.0
      %247 = vmatpush1.msra.mxu0 %v182
      %248 = vmatprep.subr.mxu0 0.0
      %249 = vmatpush1.msra.mxu0 %v183
      %250 = vmatprep.subr.mxu0 0.0
      %251 = vmatpush1.msra.mxu0 %v184
      %252 = vmatprep.subr.mxu0 0.0
      %253 = vmatpush1.msra.mxu0 %v185
      %254 = vmatprep.subr.mxu0 0.0
      %255 = vmatpush1.msra.mxu0 %v186
      %256 = vmatprep.subr.mxu0 0.0
      %257 = vmatpush1.msra.mxu0 %v187
      %258 = vmatprep.subr.mxu0 0.0
      %259 = vmatpush1.msra.mxu0 %v188
      %260 = vmatprep.subr.mxu0 0.0
      %261 = vmatpush1.msra.mxu0 %v189
      %262 = vmatprep.subr.mxu0 0.0
      %263 = vmatpush1.msra.mxu0 %v190
      %264 = vmatprep.subr.mxu0 0.0
      %265 = vmatpush1.msra.mxu0 %v191
      %266 = vmatprep.subr.mxu0 0.0
      %267 = vmatpush1.msra.mxu0 %v192
      %268 = vmatprep.subr.mxu0 0.0
      %269 = vmatpush1.msra.mxu0 %v193
      %270 = vmatprep.subr.mxu0 0.0
      %271 = vmatpush1.msra.mxu0 %v194
      %272 = vmatprep.subr.mxu0 0.0
      %273 = vmatpush1.msra.mxu0 %v195
      %274 = vmatprep.subr.mxu0 0.0
      %275 = vmatpush1.msra.mxu0 %v196
      %276 = vmatprep.subr.mxu0 0.0
      %277 = vmatpush1.msra.mxu0 %v197
      %278 = vmatprep.subr.mxu0 0.0
      %279 = vmatpush1.msra.mxu0 %v198
      %280 = vmatprep.subr.mxu0 0.0
      %281 = vmatpush1.msra.mxu0 %v199
      %282 = vmatprep.subr.mxu0 0.0
      %283 = vmatpush1.msra.mxu0 %v200
      %284 = vmatprep.subr.mxu0 0.0
      %285 = vmatpush1.msra.mxu0 %v201
      %286 = vmatprep.subr.mxu0 0.0
      %287 = vmatpush1.msra.mxu0 %v202
      %288 = vmatprep.subr.mxu0 0.0
      %289 = vmatpush1.msra.mxu0 %v203
      %290 = vmatprep.subr.mxu0 0.0
      %291 = vmatpush1.msra.mxu0 %v204
      %292 = vmatprep.subr.mxu0 0.0
      %293 = vmatpush1.msra.mxu0 %v205
      %294 = vmatprep.subr.mxu0 0.0
      %295 = vmatpush1.msra.mxu0 %v206
      %296 = vmatprep.subr.mxu0 0.0
      %297 = vmatpush1.msra.mxu0 %v207
      %298 = vmatprep.subr.mxu0 0.0
      %299 = vmatpush1.msra.mxu0 %v208
      %300 = vmatprep.mubr.f32.mxu0 %v172
      %301 = vmatmul.mubr.f32.gmra.mrb[0].mxu0 %v171
      %v302 = vpop.f32.mrb[0].mxu0
      %v303 = vadd.f32 %v223, %v302
      %v304 = vpop.f32.mrb[0].mxu0
      %305 = vmatprep.mubr.f32.mxu0 %v175
      %306 = vmatmul.mubr.f32.gmra.mrb[0].mxu0 %v174
      %v307 = vpop.f32.mrb[0].mxu0
      %v308 = vadd.f32 %v223, %v307
      %v309 = vpop.f32.mrb[0].mxu0
      %310 = vdwg.mxu0
      %311 = vmatprep.subr.mxu0 0.0
      %312 = vmatpush1.msra.mxu0 %v209
      %313 = vmatprep.subr.mxu0 0.0
      %314 = vmatpush1.msra.mxu0 %v210
      %315 = vmatprep.subr.mxu0 0.0
      %316 = vmatpush1.msra.mxu0 %v211
      %317 = vmatprep.subr.mxu0 0.0
      %318 = vmatpush1.msra.mxu0 %v212
      %319 = vmatprep.subr.mxu0 0.0
      %320 = vmatpush1.msra.mxu0 %v213
      %321 = vmatprep.subr.mxu0 0.0
      %322 = vmatpush1.msra.mxu0 %v214
      %323 = vmatprep.subr.mxu0 0.0
      %324 = vmatpush1.msra.mxu0 %v215
      %325 = vmatprep.subr.mxu0 0.0
      %326 = vmatpush1.msra.mxu0 %v216
      %327 = vmatprep.subr.mxu0 0.0
      %328 = vmatpush1.msra.mxu0 %v234
      %329 = vmatprep.subr.mxu0 0.0
      %330 = vmatpush1.msra.mxu0 0.0
      %331 = vmatprep.subr.mxu0 0.0
      %332 = vmatpush1.msra.mxu0 0.0
      %333 = vmatprep.subr.mxu0 0.0
      %334 = vmatpush1.msra.mxu0 0.0
      %335 = vmatprep.subr.mxu0 0.0
      %336 = vmatpush1.msra.mxu0 0.0
      %337 = vmatprep.subr.mxu0 0.0
      %338 = vmatpush1.msra.mxu0 0.0
      %339 = vmatprep.subr.mxu0 0.0
      %340 = vmatpush1.msra.mxu0 0.0
      %341 = vmatprep.subr.mxu0 0.0
      %342 = vmatpush1.msra.mxu0 0.0
      %343 = vmatprep.subr.mxu0 0.0
      %344 = vmatpush1.msra.mxu0 0.0
      %345 = vmatprep.subr.mxu0 0.0
      %346 = vmatpush1.msra.mxu0 0.0
      %347 = vmatprep.subr.mxu0 0.0
      %348 = vmatpush1.msra.mxu0 0.0
      %349 = vmatprep.subr.mxu0 0.0
      %350 = vmatpush1.msra.mxu0 0.0
      %351 = vmatprep.subr.mxu0 0.0
      %352 = vmatpush1.msra.mxu0 0.0
      %353 = vmatprep.subr.mxu0 0.0
      %354 = vmatpush1.msra.mxu0 0.0
      %355 = vmatprep.subr.mxu0 0.0
      %356 = vmatpush1.msra.mxu0 0.0
      %357 = vmatprep.subr.mxu0 0.0
      %358 = vmatpush1.msra.mxu0 0.0
      %359 = vmatprep.subr.mxu0 0.0
      %360 = vmatpush1.msra.mxu0 0.0
      %361 = vmatprep.subr.mxu0 0.0
      %362 = vmatpush1.msra.mxu0 0.0
      %363 = vmatprep.subr.mxu0 0.0
      %364 = vmatpush1.msra.mxu0 0.0
      %365 = vmatprep.subr.mxu0 0.0
      %366 = vmatpush1.msra.mxu0 0.0
      %367 = vmatprep.subr.mxu0 0.0
      %368 = vmatpush1.msra.mxu0 0.0
      %369 = vmatprep.subr.mxu0 0.0
      %370 = vmatpush1.msra.mxu0 0.0
      %371 = vmatprep.subr.mxu0 0.0
      %372 = vmatpush1.msra.mxu0 0.0
      %373 = vmatprep.subr.mxu0 0.0
      %374 = vmatpush1.msra.mxu0 0.0
      %375 = vmatprep.mubr.f32.mxu0 0.0
      %376 = vmatmul.mubr.f32.gmra.mrb[0].mxu0 %v227
      %v377 = vpop.f32.mrb[0].mxu0
      %v378 = vadd.f32 %v303, %v377
      %v379 = vpop.f32.mrb[0].mxu0
      %380 = vmatprep.mubr.f32.mxu0 0.0
      %381 = vmatmul.mubr.f32.gmra.mrb[0].mxu0 %v230
      %v382 = vpop.f32.mrb[0].mxu0
      %v383 = vadd.f32 %v308, %v382
      %v384 = vpop.f32.mrb[0].mxu0
      %385 = vdwg.mxu0
      %v386 = vmul.f32 %v378, %v378
      %v387 = vmul.f32 %v383, %v383
      %vm388 = vcmask 64512
      %v389 = vsel %vm388, %v386, 0.0
      %390 = vadd.xlane.f32.xlu0 %v389
      %v391 = vpop.xlane.xlu0 %390
      %v392 = vsel %vm388, %v387, 0.0
      %393 = vadd.xlane.f32.xlu0 %v392
      %v394 = vpop.xlane.xlu0 %393
      %v395 = vrsqrt.pop %v391
      %v396 = vrsqrt.pop %v394
      %v397 = vmul.f32 %v391, %v395
      %v398 = vmul.f32 %v394, %v396
      %v399 = vadd.f32 %v391, 1.0
      %v400 = vadd.f32 %v394, 1.0
      %v401 = vrcp.pop %v399
      %v402 = vmul.f32 %v397, %v401
      %v403 = vrcp.pop %v400
      %v404 = vmul.f32 %v398, %v403
      %v405 = vmul.f32 %v378, %v402
      %v406 = vmul.f32 %v383, %v404
      %409 = vrot.lane.b32.xlu0 %v386, 120
      %v410 = vpop.permute.xlu0 %409
      %411 = vrot.lane.b32.xlu0 %v387, 120
      %v412 = vpop.permute.xlu0 %411
      %v415 = vsel %vm388, %v410, 0.0
      %416 = vadd.xlane.f32.xlu0 %v415
      %v417 = vpop.xlane.xlu0 %416
      %v418 = vsel %vm388, %v412, 0.0
      %419 = vadd.xlane.f32.xlu0 %v418
      %v420 = vpop.xlane.xlu0 %419
      %v421 = vrsqrt.pop %v417
      %v422 = vrsqrt.pop %v420
      %v423 = vmul.f32 %v417, %v421
      %v424 = vmul.f32 %v420, %v422
      %v425 = vadd.f32 %v417, 1.0
      %v426 = vadd.f32 %v420, 1.0
      %v427 = vrcp.pop %v425
      %v428 = vmul.f32 %v423, %v427
      %v429 = vrcp.pop %v426
      %v430 = vmul.f32 %v424, %v429
      %v431 = vmul.f32 %v378, %v428
      %v432 = vmul.f32 %v383, %v430
      %433 = vrot.lane.b32.xlu0 %v386, 112
      %v434 = vpop.permute.xlu0 %433
      %435 = vrot.lane.b32.xlu0 %v387, 112
      %v436 = vpop.permute.xlu0 %435
      %v439 = vsel %vm388, %v434, 0.0
      %440 = vadd.xlane.f32.xlu0 %v439
      %v441 = vpop.xlane.xlu0 %440
      %v442 = vsel %vm388, %v436, 0.0
      %443 = vadd.xlane.f32.xlu0 %v442
      %v444 = vpop.xlane.xlu0 %443
      %v445 = vrsqrt.pop %v441
      %v446 = vrsqrt.pop %v444
      %v447 = vmul.f32 %v441, %v445
      %v448 = vmul.f32 %v444, %v446
      %v449 = vadd.f32 %v441, 1.0
      %v450 = vadd.f32 %v444, 1.0
      %v451 = vrcp.pop %v449
      %v452 = vmul.f32 %v447, %v451
      %v453 = vrcp.pop %v450
      %v454 = vmul.f32 %v448, %v453
      %v455 = vmul.f32 %v378, %v452
      %v456 = vmul.f32 %v383, %v454
      %457 = vrot.lane.b32.xlu0 %v386, 104
      %v458 = vpop.permute.xlu0 %457
      %459 = vrot.lane.b32.xlu0 %v387, 104
      %v460 = vpop.permute.xlu0 %459
      %v463 = vsel %vm388, %v458, 0.0
      %464 = vadd.xlane.f32.xlu0 %v463
      %v465 = vpop.xlane.xlu0 %464
      %v466 = vsel %vm388, %v460, 0.0
      %467 = vadd.xlane.f32.xlu0 %v466
      %v468 = vpop.xlane.xlu0 %467
      %v469 = vrsqrt.pop %v465
      %v470 = vrsqrt.pop %v468
      %v471 = vmul.f32 %v465, %v469
      %v472 = vmul.f32 %v468, %v470
      %v473 = vadd.f32 %v465, 1.0
      %v474 = vadd.f32 %v468, 1.0
      %v475 = vrcp.pop %v473
      %v476 = vmul.f32 %v471, %v475
      %v477 = vrcp.pop %v474
      %v478 = vmul.f32 %v472, %v477
      %v479 = vmul.f32 %v378, %v476
      %v480 = vmul.f32 %v383, %v478
      %481 = vrot.lane.b32.xlu0 %v386, 96
      %v482 = vpop.permute.xlu0 %481
      %483 = vrot.lane.b32.xlu0 %v387, 96
      %v484 = vpop.permute.xlu0 %483
      %v487 = vsel %vm388, %v482, 0.0
      %488 = vadd.xlane.f32.xlu0 %v487
      %v489 = vpop.xlane.xlu0 %488
      %v490 = vsel %vm388, %v484, 0.0
      %491 = vadd.xlane.f32.xlu0 %v490
      %v492 = vpop.xlane.xlu0 %491
      %v493 = vrsqrt.pop %v489
      %v494 = vrsqrt.pop %v492
      %v495 = vmul.f32 %v489, %v493
      %v496 = vmul.f32 %v492, %v494
      %v497 = vadd.f32 %v489, 1.0
      %v498 = vadd.f32 %v492, 1.0
      %v499 = vrcp.pop %v497
      %v500 = vmul.f32 %v495, %v499
      %v501 = vrcp.pop %v498
      %v502 = vmul.f32 %v496, %v501
      %v503 = vmul.f32 %v378, %v500
      %v504 = vmul.f32 %v383, %v502
      %505 = vrot.lane.b32.xlu0 %v386, 88
      %v506 = vpop.permute.xlu0 %505
      %507 = vrot.lane.b32.xlu0 %v387, 88
      %v508 = vpop.permute.xlu0 %507
      %v511 = vsel %vm388, %v506, 0.0
      %512 = vadd.xlane.f32.xlu0 %v511
      %v513 = vpop.xlane.xlu0 %512
      %v514 = vsel %vm388, %v508, 0.0
      %515 = vadd.xlane.f32.xlu0 %v514
      %v516 = vpop.xlane.xlu0 %515
      %v517 = vrsqrt.pop %v513
      %v518 = vrsqrt.pop %v516
      %v519 = vmul.f32 %v513, %v517
      %v520 = vmul.f32 %v516, %v518
      %v521 = vadd.f32 %v513, 1.0
      %v522 = vadd.f32 %v516, 1.0
      %v523 = vrcp.pop %v521
      %v524 = vmul.f32 %v519, %v523
      %v525 = vrcp.pop %v522
      %v526 = vmul.f32 %v520, %v525
      %v527 = vmul.f32 %v378, %v524
      %v528 = vmul.f32 %v383, %v526
      %529 = vrot.lane.b32.xlu0 %v386, 80
      %v530 = vpop.permute.xlu0 %529
      %531 = vrot.lane.b32.xlu0 %v387, 80
      %v532 = vpop.permute.xlu0 %531
      %v535 = vsel %vm388, %v530, 0.0
      %536 = vadd.xlane.f32.xlu0 %v535
      %v537 = vpop.xlane.xlu0 %536
      %v538 = vsel %vm388, %v532, 0.0
      %539 = vadd.xlane.f32.xlu0 %v538
      %v540 = vpop.xlane.xlu0 %539
      %v541 = vrsqrt.pop %v537
      %v542 = vrsqrt.pop %v540
      %v543 = vmul.f32 %v537, %v541
      %v544 = vmul.f32 %v540, %v542
      %v545 = vadd.f32 %v537, 1.0
      %v546 = vadd.f32 %v540, 1.0
      %v547 = vrcp.pop %v545
      %v548 = vmul.f32 %v543, %v547
      %v549 = vrcp.pop %v546
      %v550 = vmul.f32 %v544, %v549
      %v551 = vmul.f32 %v378, %v548
      %v552 = vmul.f32 %v383, %v550
      %553 = vrot.lane.b32.xlu0 %v386, 72
      %v554 = vpop.permute.xlu0 %553
      %555 = vrot.lane.b32.xlu0 %v387, 72
      %v556 = vpop.permute.xlu0 %555
      %v559 = vsel %vm388, %v554, 0.0
      %560 = vadd.xlane.f32.xlu0 %v559
      %v561 = vpop.xlane.xlu0 %560
      %v562 = vsel %vm388, %v556, 0.0
      %563 = vadd.xlane.f32.xlu0 %v562
      %v564 = vpop.xlane.xlu0 %563
      %v565 = vrsqrt.pop %v561
      %v566 = vrsqrt.pop %v564
      %v567 = vmul.f32 %v561, %v565
      %v568 = vmul.f32 %v564, %v566
      %v569 = vadd.f32 %v561, 1.0
      %v570 = vadd.f32 %v564, 1.0
      %v571 = vrcp.pop %v569
      %v572 = vmul.f32 %v567, %v571
      %v573 = vrcp.pop %v570
      %v574 = vmul.f32 %v568, %v573
      %v575 = vmul.f32 %v378, %v572
      %v576 = vmul.f32 %v383, %v574
      %579 = vrot.lane.b32.xlu0 %v431, 120
      %v580 = vpop.permute.xlu0 %579
      %581 = vrot.lane.b32.xlu0 %v432, 120
      %v582 = vpop.permute.xlu0 %581
      %587 = vrot.lane.b32.xlu0 %v455, 112
      %v588 = vpop.permute.xlu0 %587
      %589 = vrot.lane.b32.xlu0 %v456, 112
      %v590 = vpop.permute.xlu0 %589
      %595 = vrot.lane.b32.xlu0 %v479, 104
      %v596 = vpop.permute.xlu0 %595
      %597 = vrot.lane.b32.xlu0 %v480, 104
      %v598 = vpop.permute.xlu0 %597
      %603 = vrot.lane.b32.xlu0 %v503, 96
      %v604 = vpop.permute.xlu0 %603
      %605 = vrot.lane.b32.xlu0 %v504, 96
      %v606 = vpop.permute.xlu0 %605
      %611 = vrot.lane.b32.xlu0 %v527, 88
      %v612 = vpop.permute.xlu0 %611
      %613 = vrot.lane.b32.xlu0 %v528, 88
      %v614 = vpop.permute.xlu0 %613
      %619 = vrot.lane.b32.xlu0 %v551, 80
      %v620 = vpop.permute.xlu0 %619
      %621 = vrot.lane.b32.xlu0 %v552, 80
      %v622 = vpop.permute.xlu0 %621
      %627 = vrot.lane.b32.xlu0 %v575, 72
      %v628 = vpop.permute.xlu0 %627
      %629 = vrot.lane.b32.xlu0 %v576, 72
      %v630 = vpop.permute.xlu0 %629
      %633 = vst.msk [vmem:[%s170] sm:$0xff] %vm388, %v405
      %634 = vst.msk [vmem:[%s170 + $0x8] sm:$0xff] %vm388, %v406
      %635 = vst.msk [vmem:[%s170 + $0x10] sm:$0xff] %vm388, %v580
      %636 = vst.msk [vmem:[%s170 + $0x18] sm:$0xff] %vm388, %v582
      %637 = vst.msk [vmem:[%s170 + $0x20] sm:$0xff] %vm388, %v588
      %638 = vst.msk [vmem:[%s170 + $0x28] sm:$0xff] %vm388, %v590
      %639 = vst.msk [vmem:[%s170 + $0x30] sm:$0xff] %vm388, %v596
      %640 = vst.msk [vmem:[%s170 + $0x38] sm:$0xff] %vm388, %v598
      %641 = vst.msk [vmem:[%s170 + $0x40] sm:$0xff] %vm388, %v604
      %642 = vst.msk [vmem:[%s170 + $0x48] sm:$0xff] %vm388, %v606
      %643 = vst.msk [vmem:[%s170 + $0x50] sm:$0xff] %vm388, %v612
      %644 = vst.msk [vmem:[%s170 + $0x58] sm:$0xff] %vm388, %v614
      %645 = vst.msk [vmem:[%s170 + $0x60] sm:$0xff] %vm388, %v620
      %646 = vst.msk [vmem:[%s170 + $0x68] sm:$0xff] %vm388, %v622
      %647 = vst.msk [vmem:[%s170 + $0x70] sm:$0xff] %vm388, %v628
      %648 = vst.msk [vmem:[%s170 + $0x78] sm:$0xff] %vm388, %v630
      %p649 = scmp.lt.s32.totalorder %s14, 1
      %s650 = scalar_select %p649, %s14, 1
      %s651 = smul.addr %s650, 16
      %s652 = smul.addr %s651, 8
      %s653 = scalar_lea.vmem %s3, %s652
      // Predicated region
      $region33: #{tpu_custom_call.1} parent=31 // pred_check
        %p654 = pneg %p100
      $region34: #{tpu_custom_call.1} parent=31 // pred_check_branch
        %656 = sbr.rel (%p654) target = $region36
      $region35: #{tpu_custom_call.1} parent=31 // pred_region
        _
      $region36: #{tpu_custom_call.1} parent=31 // pred_fallthru
        _
    $region32: #{tpu_custom_call.1} parent=5 // pred_fallthru
      _
    %p657 = scmp.le.s32.totalorder 2, %s9
    // Predicated region
    $region37: #{tpu_custom_call.1} parent=5 // pred_check
      %p658 = pneg %p657
    $region38: #{tpu_custom_call.1} parent=5 // pred_check_branch
      %660 = sbr.rel (%p658) target = $region40
    $region39: #{tpu_custom_call.1} parent=5 // pred_region
      %s661 = ssub.s32 %s9, 2
      // Predicated region
      $region41: #{tpu_custom_call.1} parent=39 // pred_check
        %p662 = pneg %p106
      $region42: #{tpu_custom_call.1} parent=39 // pred_check_branch
        %664 = sbr.rel (%p662) target = $region44
      $region43: #{tpu_custom_call.1} parent=39 // pred_region
        %p665 = scmp.lt.s32.totalorder %s15, 1
        %s666 = scalar_select %p665, %s15, 1
        %s667 = smul.addr %s666, 16
        %s668 = smul.addr %s667, 8
        %s669 = scalar_lea.vmem %s3, %s668
      $region44: #{tpu_custom_call.1} parent=39 // pred_fallthru
        _
    $region40: #{tpu_custom_call.1} parent=5 // pred_fallthru
      _
  $region6: #{tpu_custom_call.1} parent=0 // loop_footer
    %s13 = sadd.s32 1, %s9
  $region7: #{tpu_custom_call.1} parent=0 // loop_footer_branch
    %8 = sbr.rel target = $region3
  $region8: #{tpu_custom_call.1} parent=0 // loop_exit
    _

</llo_original>
